<compile_context>
chip_gen: v6e
topology: v6e:2x2x1
jax: 0.10.0
libtpu: 0.0.40
codegen_flags: <defaults>
</compile_context>

<pallas_src>
import functools

import jax
import jax.numpy as jnp
from jax import lax
from jax.experimental import pallas as pl
from jax.experimental.pallas import tpu as pltpu


def _qkv_proj_kernel(x_ref, w_qkv_ref, b_qkv_ref, q_ref, k_ref, v_ref, *, num_heads):
    """Project one (1, TS, E) x-tile into head-major Q/K/V (1, H, TS, D) bf16."""
    E = x_ref.shape[-1]
    D = E // num_heads

    x = x_ref[0]                                                   # (TS, E) bf16
    qkv = jnp.dot(x, w_qkv_ref[...],                               # (TS, 3E) f32
                  preferred_element_type=jnp.float32) + b_qkv_ref[...]
    qkv = qkv.astype(jnp.bfloat16)

    # Re-layout to head-major once here, so the attention kernel's per-head
    # accesses are full blocks (never sub-128-lane column slices per q-tile).
    for h in range(num_heads):
        q_ref[0, h] = qkv[:, h * D:(h + 1) * D]
        k_ref[0, h] = qkv[:, E + h * D:E + (h + 1) * D]
        v_ref[0, h] = qkv[:, 2 * E + h * D:2 * E + (h + 1) * D]


def _attn_kernel(q_ref, k_ref, v_ref, w_out_ref, b_out_ref, o_ref, *, num_heads):
    """Per (batch, q-tile) attention + output projection.

    q_ref: (1, H, TQ, D) bf16 (already scaled by 1/sqrt(D) at pack time)
    k_ref, v_ref: (1, H, S, D) bf16
    w_out_ref: (H, D, E) bf16, b_out_ref: (1, E) f32, o_ref: (1, TQ, E)
    """
    # TODO(synk): for very long S, replace the full-S score matrix below with a
    #             flash-style online-softmax KV-tile loop (v7x 64 MiB VMEM).
    # TODO(synk): for num_heads >= 8, switch this static loop to lax.fori_loop
    #             (unroll 1-2) to bound unrolled code size / vreg live ranges.
    acc = None
    for h in range(num_heads):
        qh = q_ref[0, h]                                           # (TQ, D) bf16
        kh = k_ref[0, h]                                           # (S, D) bf16
        vh = v_ref[0, h]                                           # (S, D) bf16

        # K^T never materialized: contract the last dims directly.
        s = lax.dot_general(                                       # (TQ, S) f32
            qh, kh, dimension_numbers=(((1,), (1,)), ((), ())),
            preferred_element_type=jnp.float32)
        s = s - jnp.max(s, axis=-1, keepdims=True)
        p = jnp.exp(s)                                             # f32 exp (safe on v5e too)
        p = p * pl.reciprocal(jnp.sum(p, axis=-1, keepdims=True), approx=True)

        ctx_h = jnp.dot(p.astype(jnp.bfloat16), vh,                # (TQ, D) f32
                        preferred_element_type=jnp.float32)
        # Output projection folded per head: no (TQ, E) ctx scratch, no concat.
        contrib = jnp.dot(ctx_h.astype(jnp.bfloat16), w_out_ref[h],
                          preferred_element_type=jnp.float32)      # (TQ, E) f32
        acc = contrib if acc is None else acc + contrib

    o_ref[0] = (acc + b_out_ref[...]).astype(o_ref.dtype)


def _choose_seq_tile(seq_len):
    for t in (512, 256, 128):
        if seq_len % t == 0:
            return t
    return seq_len


def _vmem_limit_bytes():
    """VMEM-aware scoped limit: ~48 MiB on v7x, ~112 MiB on v5e/v6e."""
    mib = 1024 * 1024
    try:
        cap = int(pltpu.get_tpu_info().vmem_capacity_bytes)
    except Exception:
        cap = 64 * mib  # conservative fallback (safe on every generation)
    return int(max(32 * mib, min(112 * mib, cap - 16 * mib)))


def pack_mha_params(params, embed_size, num_heads):
    """One-time weight prep (transpose / pack / scale-fold / cast), outside the call path."""
    E = embed_size
    D = E // num_heads
    scale = 1.0 / float(D) ** 0.5

    in_w = params["in_proj_weight"]                   # (3E, E) rows = [Wq; Wk; Wv]
    w_qkv = in_w.T.astype(jnp.float32)                # (E, 3E) = [Wq^T | Wk^T | Wv^T]
    b_qkv = params["in_proj_bias"].reshape(1, 3 * E).astype(jnp.float32)

    # Fold PyTorch's 1/sqrt(D) query pre-scaling into the packed Q columns.
    col_scale = jnp.concatenate(
        [jnp.full((E,), scale, jnp.float32), jnp.ones((2 * E,), jnp.float32)])
    w_qkv = (w_qkv * col_scale).astype(jnp.bfloat16)
    b_qkv = (b_qkv * col_scale).astype(jnp.float32)

    # out = ctx @ W_o^T + b_o ; rows of W_o^T are head-major -> (H, D, E).
    w_out = params["out_proj_weight"].T.reshape(num_heads, D, E).astype(jnp.bfloat16)
    b_out = params["out_proj_bias"].reshape(1, E).astype(jnp.float32)
    return {"w_qkv": w_qkv, "b_qkv": b_qkv, "w_out": w_out, "b_out": b_out}


def multi_head_attention(x, packed, num_heads):
    """x: (B, S, E) float32. packed: output of pack_mha_params. Returns (B, S, E)."""
    B, S, E = x.shape
    assert E % num_heads == 0, "embed_size must be divisible by num_heads"
    H = num_heads
    D = E // H
    ts = _choose_seq_tile(S)
    tq = _choose_seq_tile(S)

    compiler_params = pltpu.CompilerParams(
        dimension_semantics=("parallel", "parallel"),
        vmem_limit_bytes=_vmem_limit_bytes(),
    )

    # Halve the activation HBM stream; the kernels compute in bf16 anyway.
    x_bf16 = x.astype(jnp.bfloat16)

    # --- Call 1: packed QKV projection -> head-major (B, H, S, D) bf16 -------
    qkv_shape = jax.ShapeDtypeStruct((B, H, S, D), jnp.bfloat16)
    q, k, v = pl.pallas_call(
        functools.partial(_qkv_proj_kernel, num_heads=H),
        out_shape=(qkv_shape, qkv_shape, qkv_shape),
        grid=(B, S // ts),
        in_specs=[
            pl.BlockSpec((1, ts, E), lambda b, si: (b, si, 0)),
            pl.BlockSpec((E, 3 * E), lambda b, si: (0, 0),
                         pipeline_mode=pl.Buffered(1)),
            pl.BlockSpec((1, 3 * E), lambda b, si: (0, 0),
                         pipeline_mode=pl.Buffered(1)),
        ],
        out_specs=(
            pl.BlockSpec((1, H, ts, D), lambda b, si: (b, 0, si, 0)),
            pl.BlockSpec((1, H, ts, D), lambda b, si: (b, 0, si, 0)),
            pl.BlockSpec((1, H, ts, D), lambda b, si: (b, 0, si, 0)),
        ),
        compiler_params=compiler_params,
    )(x_bf16, packed["w_qkv"], packed["b_qkv"])

    # --- Call 2: attention + output projection -------------------------------
    out = pl.pallas_call(
        functools.partial(_attn_kernel, num_heads=H),
        out_shape=jax.ShapeDtypeStruct((B, S, E), x.dtype),
        grid=(B, S // tq),
        in_specs=[
            pl.BlockSpec((1, H, tq, D), lambda b, qi: (b, 0, qi, 0)),   # Q tile
            pl.BlockSpec((1, H, S, D), lambda b, qi: (b, 0, 0, 0)),     # K (full seq, re-DMA'd only when b changes)
            pl.BlockSpec((1, H, S, D), lambda b, qi: (b, 0, 0, 0)),     # V (full seq)
            pl.BlockSpec((H, D, E), lambda b, qi: (0, 0, 0),
                         pipeline_mode=pl.Buffered(1)),                 # out-proj weight
            pl.BlockSpec((1, E), lambda b, qi: (0, 0),
                         pipeline_mode=pl.Buffered(1)),                 # out-proj bias
        ],
        out_specs=pl.BlockSpec((1, tq, E), lambda b, qi: (b, qi, 0)),
        compiler_params=compiler_params,
    )(q, k, v, packed["w_out"], packed["b_out"])
    return out


def _reference(x, params, num_heads):
    """Pure-JAX f32 reference matching torch.nn.MultiheadAttention forward."""
    B, S, E = x.shape
    D = E // num_heads
    in_w = params["in_proj_weight"]
    in_b = params["in_proj_bias"]
    q = x @ in_w[0 * E:1 * E].T + in_b[0 * E:1 * E]
    k = x @ in_w[1 * E:2 * E].T + in_b[1 * E:2 * E]
    v = x @ in_w[2 * E:3 * E].T + in_b[2 * E:3 * E]
    qh = q.reshape(B, S, num_heads, D).transpose(0, 2, 1, 3)
    kh = k.reshape(B, S, num_heads, D).transpose(0, 2, 1, 3)
    vh = v.reshape(B, S, num_heads, D).transpose(0, 2, 1, 3)
    s = jnp.einsum("bhqd,bhkd->bhqk", qh, kh) / jnp.sqrt(jnp.float32(D))
    p = jax.nn.softmax(s, axis=-1)
    ctx = jnp.einsum("bhqk,bhkd->bhqd", p, vh)
    ctx = ctx.transpose(0, 2, 1, 3).reshape(B, S, E)
    return ctx @ params["out_proj_weight"].T + params["out_proj_bias"]


if __name__ == "__main__":
    B, S, E, H = 2, 8, 32, 4

    key = jax.random.PRNGKey(0)
    kx, kw1, kb1, kw2, kb2 = jax.random.split(key, 5)

    x = jax.random.normal(kx, (B, S, E), dtype=jnp.float32)
    params = {
        "in_proj_weight": 0.1 * jax.random.normal(kw1, (3 * E, E), dtype=jnp.float32),
        "in_proj_bias": 0.05 * jax.random.normal(kb1, (3 * E,), dtype=jnp.float32),
        "out_proj_weight": 0.1 * jax.random.normal(kw2, (E, E), dtype=jnp.float32),
        "out_proj_bias": 0.05 * jax.random.normal(kb2, (E,), dtype=jnp.float32),
    }

    packed = pack_mha_params(params, E, H)
    out = multi_head_attention(x, packed, num_heads=H)
    out = jax.block_until_ready(out)

    ref = _reference(x, params, num_heads=H)
    assert out.shape == (B, S, E)
    # bf16 inputs/operands with f32 accumulation -> tolerance relaxed vs pure f32.
    assert jnp.allclose(out, ref, atol=3e-2, rtol=3e-2), \
        f"max abs err {jnp.max(jnp.abs(out - ref))}"

    print("KERNEL_OK")
</pallas_src>

<mosaic_0001>
module attributes {stable_mosaic.version = 11 : i64} {
  func.func @_qkv_proj_kernel(%arg0: i32, %arg1: i32, %arg2: memref<1x8x32xbf16, #tpu.memory_space<vmem>>, %arg3: memref<32x96xbf16, #tpu.memory_space<vmem>>, %arg4: memref<1x96xf32, #tpu.memory_space<vmem>>, %arg5: memref<1x4x8x8xbf16, #tpu.memory_space<vmem>>, %arg6: memref<1x4x8x8xbf16, #tpu.memory_space<vmem>>, %arg7: memref<1x4x8x8xbf16, #tpu.memory_space<vmem>>) attributes {dimension_semantics = [#tpu.dimension_semantics<parallel>, #tpu.dimension_semantics<parallel>], iteration_bounds = array<i64: 2, 1>, scalar_prefetch = 0 : i64, scratch_operands = 0 : i64, tpu.core_type = #tpu.core_type<tc>, window_params = [{transform_indices = @transform_0, window_bounds = array<i64: 1, 8, 32>}, {pipeline_mode = #tpu.pipeline_mode<synchronous>, transform_indices = @transform_1, window_bounds = array<i64: 32, 96>}, {pipeline_mode = #tpu.pipeline_mode<synchronous>, transform_indices = @transform_2, window_bounds = array<i64: 1, 96>}, {transform_indices = @transform_3, window_bounds = array<i64: 1, 4, 8, 8>}, {transform_indices = @transform_4, window_bounds = array<i64: 1, 4, 8, 8>}, {transform_indices = @transform_5, window_bounds = array<i64: 1, 4, 8, 8>}]} {
    %c0 = arith.constant 0 : index
    %c0_0 = arith.constant 0 : index
    %c0_1 = arith.constant 0 : index
    %0 = vector.load %arg2[%c0, %c0_0, %c0_1] : memref<1x8x32xbf16, #tpu.memory_space<vmem>>, vector<1x8x32xbf16>
    %1 = vector.shape_cast %0 : vector<1x8x32xbf16> to vector<8x32xbf16>
    %c0_2 = arith.constant 0 : index
    %c0_3 = arith.constant 0 : index
    %2 = vector.load %arg3[%c0_2, %c0_3] : memref<32x96xbf16, #tpu.memory_space<vmem>>, vector<32x96xbf16>
    %cst = arith.constant dense<0.000000e+00> : vector<8x96xf32>
    %3 = tpu.matmul %1, %2, %cst {dimension_numbers = #tpu.dot_dimension_numbers<[1], [0], [0], [1], [0, 0, 1, 1], [], []>} : vector<8x32xbf16>, vector<32x96xbf16>, vector<8x96xf32> -> vector<8x96xf32>
    %c0_4 = arith.constant 0 : index
    %c0_5 = arith.constant 0 : index
    %4 = vector.load %arg4[%c0_4, %c0_5] : memref<1x96xf32, #tpu.memory_space<vmem>>, vector<1x96xf32>
    %5 = vector.broadcast %4 : vector<1x96xf32> to vector<8x96xf32>
    %6 = arith.addf %3, %5 : vector<8x96xf32>
    %7 = arith.truncf %6 : vector<8x96xf32> to vector<8x96xbf16>
    %8 = vector.extract_strided_slice %7 {offsets = [0, 0], sizes = [8, 8], strides = [1, 1]} : vector<8x96xbf16> to vector<8x8xbf16>
    %c0_6 = arith.constant 0 : index
    %c0_7 = arith.constant 0 : index
    %c0_8 = arith.constant 0 : index
    %c0_9 = arith.constant 0 : index
    %9 = vector.load %arg5[%c0_6, %c0_7, %c0_8, %c0_9] : memref<1x4x8x8xbf16, #tpu.memory_space<vmem>>, vector<1x1x8x8xbf16>
    %10 = vector.shape_cast %9 : vector<1x1x8x8xbf16> to vector<8x8xbf16>
    %11 = vector.shape_cast %8 : vector<8x8xbf16> to vector<1x1x8x8xbf16>
    tpu.vector_store %arg5[%c0_6, %c0_7, %c0_8, %c0_9], %11 {strides = array<i32>} : memref<1x4x8x8xbf16, #tpu.memory_space<vmem>>, vector<1x1x8x8xbf16>,
    %12 = vector.extract_strided_slice %7 {offsets = [0, 32], sizes = [8, 8], strides = [1, 1]} : vector<8x96xbf16> to vector<8x8xbf16>
    %c0_10 = arith.constant 0 : index
    %c0_11 = arith.constant 0 : index
    %c0_12 = arith.constant 0 : index
    %c0_13 = arith.constant 0 : index
    %13 = vector.load %arg6[%c0_10, %c0_11, %c0_12, %c0_13] : memref<1x4x8x8xbf16, #tpu.memory_space<vmem>>, vector<1x1x8x8xbf16>
    %14 = vector.shape_cast %13 : vector<1x1x8x8xbf16> to vector<8x8xbf16>
    %15 = vector.shape_cast %12 : vector<8x8xbf16> to vector<1x1x8x8xbf16>
    tpu.vector_store %arg6[%c0_10, %c0_11, %c0_12, %c0_13], %15 {strides = array<i32>} : memref<1x4x8x8xbf16, #tpu.memory_space<vmem>>, vector<1x1x8x8xbf16>,
    %16 = vector.extract_strided_slice %7 {offsets = [0, 64], sizes = [8, 8], strides = [1, 1]} : vector<8x96xbf16> to vector<8x8xbf16>
    %c0_14 = arith.constant 0 : index
    %c0_15 = arith.constant 0 : index
    %c0_16 = arith.constant 0 : index
    %c0_17 = arith.constant 0 : index
    %17 = vector.load %arg7[%c0_14, %c0_15, %c0_16, %c0_17] : memref<1x4x8x8xbf16, #tpu.memory_space<vmem>>, vector<1x1x8x8xbf16>
    %18 = vector.shape_cast %17 : vector<1x1x8x8xbf16> to vector<8x8xbf16>
    %19 = vector.shape_cast %16 : vector<8x8xbf16> to vector<1x1x8x8xbf16>
    tpu.vector_store %arg7[%c0_14, %c0_15, %c0_16, %c0_17], %19 {strides = array<i32>} : memref<1x4x8x8xbf16, #tpu.memory_space<vmem>>, vector<1x1x8x8xbf16>,
    %20 = vector.extract_strided_slice %7 {offsets = [0, 8], sizes = [8, 8], strides = [1, 1]} : vector<8x96xbf16> to vector<8x8xbf16>
    %c0_18 = arith.constant 0 : index
    %c1 = arith.constant 1 : index
    %c0_19 = arith.constant 0 : index
    %c0_20 = arith.constant 0 : index
    %21 = vector.load %arg5[%c0_18, %c1, %c0_19, %c0_20] : memref<1x4x8x8xbf16, #tpu.memory_space<vmem>>, vector<1x1x8x8xbf16>
    %22 = vector.shape_cast %21 : vector<1x1x8x8xbf16> to vector<8x8xbf16>
    %23 = vector.shape_cast %20 : vector<8x8xbf16> to vector<1x1x8x8xbf16>
    tpu.vector_store %arg5[%c0_18, %c1, %c0_19, %c0_20], %23 {strides = array<i32>} : memref<1x4x8x8xbf16, #tpu.memory_space<vmem>>, vector<1x1x8x8xbf16>,
    %24 = vector.extract_strided_slice %7 {offsets = [0, 40], sizes = [8, 8], strides = [1, 1]} : vector<8x96xbf16> to vector<8x8xbf16>
    %c0_21 = arith.constant 0 : index
    %c1_22 = arith.constant 1 : index
    %c0_23 = arith.constant 0 : index
    %c0_24 = arith.constant 0 : index
    %25 = vector.load %arg6[%c0_21, %c1_22, %c0_23, %c0_24] : memref<1x4x8x8xbf16, #tpu.memory_space<vmem>>, vector<1x1x8x8xbf16>
    %26 = vector.shape_cast %25 : vector<1x1x8x8xbf16> to vector<8x8xbf16>
    %27 = vector.shape_cast %24 : vector<8x8xbf16> to vector<1x1x8x8xbf16>
    tpu.vector_store %arg6[%c0_21, %c1_22, %c0_23, %c0_24], %27 {strides = array<i32>} : memref<1x4x8x8xbf16, #tpu.memory_space<vmem>>, vector<1x1x8x8xbf16>,
    %28 = vector.extract_strided_slice %7 {offsets = [0, 72], sizes = [8, 8], strides = [1, 1]} : vector<8x96xbf16> to vector<8x8xbf16>
    %c0_25 = arith.constant 0 : index
    %c1_26 = arith.constant 1 : index
    %c0_27 = arith.constant 0 : index
    %c0_28 = arith.constant 0 : index
    %29 = vector.load %arg7[%c0_25, %c1_26, %c0_27, %c0_28] : memref<1x4x8x8xbf16, #tpu.memory_space<vmem>>, vector<1x1x8x8xbf16>
    %30 = vector.shape_cast %29 : vector<1x1x8x8xbf16> to vector<8x8xbf16>
    %31 = vector.shape_cast %28 : vector<8x8xbf16> to vector<1x1x8x8xbf16>
    tpu.vector_store %arg7[%c0_25, %c1_26, %c0_27, %c0_28], %31 {strides = array<i32>} : memref<1x4x8x8xbf16, #tpu.memory_space<vmem>>, vector<1x1x8x8xbf16>,
    %32 = vector.extract_strided_slice %7 {offsets = [0, 16], sizes = [8, 8], strides = [1, 1]} : vector<8x96xbf16> to vector<8x8xbf16>
    %c0_29 = arith.constant 0 : index
    %c2 = arith.constant 2 : index
    %c0_30 = arith.constant 0 : index
    %c0_31 = arith.constant 0 : index
    %33 = vector.load %arg5[%c0_29, %c2, %c0_30, %c0_31] : memref<1x4x8x8xbf16, #tpu.memory_space<vmem>>, vector<1x1x8x8xbf16>
    %34 = vector.shape_cast %33 : vector<1x1x8x8xbf16> to vector<8x8xbf16>
    %35 = vector.shape_cast %32 : vector<8x8xbf16> to vector<1x1x8x8xbf16>
    tpu.vector_store %arg5[%c0_29, %c2, %c0_30, %c0_31], %35 {strides = array<i32>} : memref<1x4x8x8xbf16, #tpu.memory_space<vmem>>, vector<1x1x8x8xbf16>,
    %36 = vector.extract_strided_slice %7 {offsets = [0, 48], sizes = [8, 8], strides = [1, 1]} : vector<8x96xbf16> to vector<8x8xbf16>
    %c0_32 = arith.constant 0 : index
    %c2_33 = arith.constant 2 : index
    %c0_34 = arith.constant 0 : index
    %c0_35 = arith.constant 0 : index
    %37 = vector.load %arg6[%c0_32, %c2_33, %c0_34, %c0_35] : memref<1x4x8x8xbf16, #tpu.memory_space<vmem>>, vector<1x1x8x8xbf16>
    %38 = vector.shape_cast %37 : vector<1x1x8x8xbf16> to vector<8x8xbf16>
    %39 = vector.shape_cast %36 : vector<8x8xbf16> to vector<1x1x8x8xbf16>
    tpu.vector_store %arg6[%c0_32, %c2_33, %c0_34, %c0_35], %39 {strides = array<i32>} : memref<1x4x8x8xbf16, #tpu.memory_space<vmem>>, vector<1x1x8x8xbf16>,
    %40 = vector.extract_strided_slice %7 {offsets = [0, 80], sizes = [8, 8], strides = [1, 1]} : vector<8x96xbf16> to vector<8x8xbf16>
    %c0_36 = arith.constant 0 : index
    %c2_37 = arith.constant 2 : index
    %c0_38 = arith.constant 0 : index
    %c0_39 = arith.constant 0 : index
    %41 = vector.load %arg7[%c0_36, %c2_37, %c0_38, %c0_39] : memref<1x4x8x8xbf16, #tpu.memory_space<vmem>>, vector<1x1x8x8xbf16>
    %42 = vector.shape_cast %41 : vector<1x1x8x8xbf16> to vector<8x8xbf16>
    %43 = vector.shape_cast %40 : vector<8x8xbf16> to vector<1x1x8x8xbf16>
    tpu.vector_store %arg7[%c0_36, %c2_37, %c0_38, %c0_39], %43 {strides = array<i32>} : memref<1x4x8x8xbf16, #tpu.memory_space<vmem>>, vector<1x1x8x8xbf16>,
    %44 = vector.extract_strided_slice %7 {offsets = [0, 24], sizes = [8, 8], strides = [1, 1]} : vector<8x96xbf16> to vector<8x8xbf16>
    %c0_40 = arith.constant 0 : index
    %c3 = arith.constant 3 : index
    %c0_41 = arith.constant 0 : index
    %c0_42 = arith.constant 0 : index
    %45 = vector.load %arg5[%c0_40, %c3, %c0_41, %c0_42] : memref<1x4x8x8xbf16, #tpu.memory_space<vmem>>, vector<1x1x8x8xbf16>
    %46 = vector.shape_cast %45 : vector<1x1x8x8xbf16> to vector<8x8xbf16>
    %47 = vector.shape_cast %44 : vector<8x8xbf16> to vector<1x1x8x8xbf16>
    tpu.vector_store %arg5[%c0_40, %c3, %c0_41, %c0_42], %47 {strides = array<i32>} : memref<1x4x8x8xbf16, #tpu.memory_space<vmem>>, vector<1x1x8x8xbf16>,
    %48 = vector.extract_strided_slice %7 {offsets = [0, 56], sizes = [8, 8], strides = [1, 1]} : vector<8x96xbf16> to vector<8x8xbf16>
    %c0_43 = arith.constant 0 : index
    %c3_44 = arith.constant 3 : index
    %c0_45 = arith.constant 0 : index
    %c0_46 = arith.constant 0 : index
    %49 = vector.load %arg6[%c0_43, %c3_44, %c0_45, %c0_46] : memref<1x4x8x8xbf16, #tpu.memory_space<vmem>>, vector<1x1x8x8xbf16>
    %50 = vector.shape_cast %49 : vector<1x1x8x8xbf16> to vector<8x8xbf16>
    %51 = vector.shape_cast %48 : vector<8x8xbf16> to vector<1x1x8x8xbf16>
    tpu.vector_store %arg6[%c0_43, %c3_44, %c0_45, %c0_46], %51 {strides = array<i32>} : memref<1x4x8x8xbf16, #tpu.memory_space<vmem>>, vector<1x1x8x8xbf16>,
    %52 = vector.extract_strided_slice %7 {offsets = [0, 88], sizes = [8, 8], strides = [1, 1]} : vector<8x96xbf16> to vector<8x8xbf16>
    %c0_47 = arith.constant 0 : index
    %c3_48 = arith.constant 3 : index
    %c0_49 = arith.constant 0 : index
    %c0_50 = arith.constant 0 : index
    %53 = vector.load %arg7[%c0_47, %c3_48, %c0_49, %c0_50] : memref<1x4x8x8xbf16, #tpu.memory_space<vmem>>, vector<1x1x8x8xbf16>
    %54 = vector.shape_cast %53 : vector<1x1x8x8xbf16> to vector<8x8xbf16>
    %55 = vector.shape_cast %52 : vector<8x8xbf16> to vector<1x1x8x8xbf16>
    tpu.vector_store %arg7[%c0_47, %c3_48, %c0_49, %c0_50], %55 {strides = array<i32>} : memref<1x4x8x8xbf16, #tpu.memory_space<vmem>>, vector<1x1x8x8xbf16>,
    return
  }
  func.func @transform_0(%arg0: i32, %arg1: i32) -> (i32, i32, i32) {
    %c0_i32 = arith.constant 0 : i32
    %c0_i32_0 = arith.constant 0 : i32
    return %arg0, %arg1, %c0_i32 : i32, i32, i32
  }
  func.func @transform_1(%arg0: i32, %arg1: i32) -> (i32, i32) {
    %c0_i32 = arith.constant 0 : i32
    %c0_i32_0 = arith.constant 0 : i32
    %c0_i32_1 = arith.constant 0 : i32
    return %c0_i32, %c0_i32_0 : i32, i32
  }
  func.func @transform_2(%arg0: i32, %arg1: i32) -> (i32, i32) {
    %c0_i32 = arith.constant 0 : i32
    %c0_i32_0 = arith.constant 0 : i32
    %c0_i32_1 = arith.constant 0 : i32
    return %c0_i32, %c0_i32_0 : i32, i32
  }
  func.func @transform_3(%arg0: i32, %arg1: i32) -> (i32, i32, i32, i32) {
    %c0_i32 = arith.constant 0 : i32
    %c0_i32_0 = arith.constant 0 : i32
    %c0_i32_1 = arith.constant 0 : i32
    return %arg0, %c0_i32, %arg1, %c0_i32_0 : i32, i32, i32, i32
  }
  func.func @transform_4(%arg0: i32, %arg1: i32) -> (i32, i32, i32, i32) {
    %c0_i32 = arith.constant 0 : i32
    %c0_i32_0 = arith.constant 0 : i32
    %c0_i32_1 = arith.constant 0 : i32
    return %arg0, %c0_i32, %arg1, %c0_i32_0 : i32, i32, i32, i32
  }
  func.func @transform_5(%arg0: i32, %arg1: i32) -> (i32, i32, i32, i32) {
    %c0_i32 = arith.constant 0 : i32
    %c0_i32_0 = arith.constant 0 : i32
    %c0_i32_1 = arith.constant 0 : i32
    return %arg0, %c0_i32, %arg1, %c0_i32_0 : i32, i32, i32, i32
  }
}

</mosaic_0001>

<llo_original>
// kernel: tpu_custom_call.1
$region0: #{tpu_custom_call.1}
  #allocation0 [shape = 'u32[]', space=smem, size = 0x4, offset = 0x4, fixed_abs, tag = 'smem constant byte address 0x4 - core index']
  #allocation1 [shape = 'u32[144,128]{1,0:T(1,128)}', space=vmem, size = 0x12000, scoped, tag = 'internal scratch']
  %s0 = inlined_call_operand.hbm [shape: bf16[2,8,32], index: 0, kind: input, shape index: {}]
  %s1 = inlined_call_operand.hbm [shape: bf16[32,96], index: 1, kind: input, shape index: {}]
  %s2 = inlined_call_operand.vmem [shape: f32[1,96], index: 2, kind: input, shape index: {}]
  %s3 = inlined_call_operand.hbm [shape: bf16[2,4,8,8], index: 3, kind: output, shape index: {0}]
  %s4 = inlined_call_operand.hbm [shape: bf16[2,4,8,8], index: 4, kind: output, shape index: {1}]
  %s5 = inlined_call_operand.hbm [shape: bf16[2,4,8,8], index: 5, kind: output, shape index: {2}]
  %6 = xla_tuple %s3, %s4, %s5
  %s7 = sld [smem:[#allocation0]]
  $region69: #{tpu_custom_call.1} parent=0
    _
  %s9 = ssub.s32 1, %s7
  %s10 = scalar_select 0, %s9, %s7
  $region1: #{tpu_custom_call.1} parent=0
    #allocation2 [shape = 'u8[4096]{0}', space=vmem, size = 0x1000, scoped, tag = 'input window, operand 0']
    #allocation3 [shape = 's32[2]{0}', space=sflag, size = 0x8, scoped, tag = 'scoped memory for tpu_custom_call.1']
    #allocation4 [shape = 's32[2]{0}', space=sflag, size = 0x8, scoped, tag = 'scoped memory for tpu_custom_call.1']
    #allocation5 [shape = 'u8[8192]{0}', space=vmem, size = 0x2000, scoped, tag = 'input window, operand 1, single buffered']
    #allocation6 [shape = 's32[1]{0}', space=sflag, size = 0x4, scoped, tag = 'scoped memory for tpu_custom_call.1']
    #allocation7 [shape = 'u8[16384]{0}', space=vmem, size = 0x4000, scoped, tag = 'output window, operand 0']
    #allocation8 [shape = 'u8[16384]{0}', space=vmem, size = 0x4000, scoped, tag = 'output window, operand 1']
    #allocation9 [shape = 's32[2]{0}', space=sflag, size = 0x8, scoped, tag = 'scoped memory for tpu_custom_call.1']
    #allocation10 [shape = 'u8[16384]{0}', space=vmem, size = 0x4000, scoped, tag = 'output window, operand 2']
    %11 = vsyncpa [#allocation3], 0
    %s12 = scalar_lea.sflag [#allocation3], 1
    %13 = vsyncpa %s12, 0
    %14 = vsyncpa [#allocation6], 0
    %15 = vsyncpa [#allocation4], 0
    %s16 = scalar_lea.sflag [#allocation4], 1
    %17 = vsyncpa %s16, 0
    %18 = vsyncpa [#allocation9], 0
    %s19 = scalar_lea.sflag [#allocation9], 1
    %20 = vsyncpa %s19, 0
    loop: start=0, step=1, limit=4
    $region2: #{tpu_custom_call.1} parent=1 // loop_pre_header
      _
    $region3: #{tpu_custom_call.1} parent=1 // loop_header
      %s22 = sphi 0, %s26
      %p23 = scmp.ge.s32.totalorder %s22, 4
      %s29 = sphi 0, %s41
      %s30 = sphi 0, %s37
      %s31 = sphi 0, %s29
      %s32 = sphi 0, %s30
      %s33 = sphi 0, %s31
      %s34 = sphi 0, %s32
      %s46 = sphi 0, %s48
      %s49 = sphi 0, %s46
      %s50 = sphi 0, %s49
      %s66 = sphi 0, %s50
      %s70 = sphi 0, %s70
      %s72 = sphi 0, %s70
      %s73 = sphi 0, %s72
      %s87 = sphi 0, %s73
      %s91 = sphi 0, %s91
      %s93 = sphi 0, %s91
      %s94 = sphi 0, %s93
      %s108 = sphi 0, %s94
      %s116 = sphi 0, %s118
      %s119 = sphi 0, %s116
      %s120 = sphi 0, %s119
      %s136 = sphi 0, %s120
      %s144 = sphi 0, %s146
      %s147 = sphi 0, %s144
      %s148 = sphi 0, %s147
      %s164 = sphi 0, %s148
      %s172 = sphi 0, %s174
      %s175 = sphi 0, %s172
      %s176 = sphi 0, %s175
      %s192 = sphi 0, %s176
    $region4: #{tpu_custom_call.1} parent=1 // loop_header_branch
      %25 = sbr.rel (%p23) target = $region8
    $region5: #{tpu_custom_call.1} parent=1 // loop_body
      %s27 = ssub.s32 %s22, 1
      %s28 = ssub.s32 %s22, 2
      %s35 = sadd.s32 1, %s30
      %p36 = scmp.ge.s32.totalorder %s35, 1
      %s37 = scalar_select %p36, 0, %s35
      %s38 = sadd.s32 1, %s29
      %s39 = scalar_select %p36, %s38, %s29
      %p40 = scmp.ge.s32.totalorder %s39, 2
      %s41 = scalar_select %p40, 0, %s39
      %s42 = ssub.s32 %s29, %s41
      %s43 = ssub.s32 %s30, %s37
      %s44 = sor.u32 %s42, %s43
      %p45 = scmp.eq.s32.totalorder %s44, 0
      %s47 = sadd.s32 %s46, 1
      %s48 = scalar_select %p45, %s46, %s47
      %p51 = pneg %p45
      %p52 = scmp.eq.s32.totalorder %s22, 1
      %p53 = por %p51, %p52
      %p54 = scmp.ne.s32.totalorder %s46, %s49
      %p55 = scmp.eq.s32.totalorder %s22, 0
      %p56 = por %p54, %p55
      %p57 = scmp.ne.s32.totalorder %s46, %s49
      %p58 = scmp.eq.s32.totalorder %s27, 1
      %p59 = por %p57, %p58
      %p60 = scmp.ne.s32.totalorder %s49, %s50
      %p61 = scmp.eq.s32.totalorder %s27, 0
      %p62 = por %p60, %p61
      %p63 = scmp.ne.s32.totalorder %s49, %s50
      %p64 = scmp.eq.s32.totalorder %s28, 1
      %p65 = por %p63, %p64
      %p67 = scmp.ne.s32.totalorder %s50, %s66
      %p68 = scmp.eq.s32.totalorder %s28, 0
      %p69 = por %p67, %p68
      %s71 = sadd.s32 %s70, 1
      %p74 = scmp.eq.s32.totalorder %s22, 1
      %p75 = scmp.ne.s32.totalorder %s70, %s72
      %p76 = scmp.eq.s32.totalorder %s22, 0
      %p77 = por %p75, %p76
      %p78 = scmp.ne.s32.totalorder %s70, %s72
      %p79 = scmp.eq.s32.totalorder %s27, 1
      %p80 = por %p78, %p79
      %p81 = scmp.ne.s32.totalorder %s72, %s73
      %p82 = scmp.eq.s32.totalorder %s27, 0
      %p83 = por %p81, %p82
      %p84 = scmp.ne.s32.totalorder %s72, %s73
      %p85 = scmp.eq.s32.totalorder %s28, 1
      %p86 = por %p84, %p85
      %p88 = scmp.ne.s32.totalorder %s73, %s87
      %p89 = scmp.eq.s32.totalorder %s28, 0
      %p90 = por %p88, %p89
      %s92 = sadd.s32 %s91, 1
      %p95 = scmp.eq.s32.totalorder %s22, 1
      %p96 = scmp.ne.s32.totalorder %s91, %s93
      %p97 = scmp.eq.s32.totalorder %s22, 0
      %p98 = por %p96, %p97
      %p99 = scmp.ne.s32.totalorder %s91, %s93
      %p100 = scmp.eq.s32.totalorder %s27, 1
      %p101 = por %p99, %p100
      %p102 = scmp.ne.s32.totalorder %s93, %s94
      %p103 = scmp.eq.s32.totalorder %s27, 0
      %p104 = por %p102, %p103
      %p105 = scmp.ne.s32.totalorder %s93, %s94
      %p106 = scmp.eq.s32.totalorder %s28, 1
      %p107 = por %p105, %p106
      %p109 = scmp.ne.s32.totalorder %s94, %s108
      %p110 = scmp.eq.s32.totalorder %s28, 0
      %p111 = por %p109, %p110
      %s112 = ssub.s32 %s29, %s41
      %s113 = ssub.s32 %s30, %s37
      %s114 = sor.u32 %s112, %s113
      %p115 = scmp.eq.s32.totalorder %s114, 0
      %s117 = sadd.s32 %s116, 1
      %s118 = scalar_select %p115, %s116, %s117
      %p121 = pneg %p115
      %p122 = scmp.eq.s32.totalorder %s22, 1
      %p123 = por %p121, %p122
      %p124 = scmp.ne.s32.totalorder %s116, %s119
      %p125 = scmp.eq.s32.totalorder %s22, 0
      %p126 = por %p124, %p125
      %p127 = scmp.ne.s32.totalorder %s116, %s119
      %p128 = scmp.eq.s32.totalorder %s27, 1
      %p129 = por %p127, %p128
      %p130 = scmp.ne.s32.totalorder %s119, %s120
      %p131 = scmp.eq.s32.totalorder %s27, 0
      %p132 = por %p130, %p131
      %p133 = scmp.ne.s32.totalorder %s119, %s120
      %p134 = scmp.eq.s32.totalorder %s28, 1
      %p135 = por %p133, %p134
      %p137 = scmp.ne.s32.totalorder %s120, %s136
      %p138 = scmp.eq.s32.totalorder %s28, 0
      %p139 = por %p137, %p138
      %s140 = ssub.s32 %s29, %s41
      %s141 = ssub.s32 %s30, %s37
      %s142 = sor.u32 %s140, %s141
      %p143 = scmp.eq.s32.totalorder %s142, 0
      %s145 = sadd.s32 %s144, 1
      %s146 = scalar_select %p143, %s144, %s145
      %p149 = pneg %p143
      %p150 = scmp.eq.s32.totalorder %s22, 1
      %p151 = por %p149, %p150
      %p152 = scmp.ne.s32.totalorder %s144, %s147
      %p153 = scmp.eq.s32.totalorder %s22, 0
      %p154 = por %p152, %p153
      %p155 = scmp.ne.s32.totalorder %s144, %s147
      %p156 = scmp.eq.s32.totalorder %s27, 1
      %p157 = por %p155, %p156
      %p158 = scmp.ne.s32.totalorder %s147, %s148
      %p159 = scmp.eq.s32.totalorder %s27, 0
      %p160 = por %p158, %p159
      %p161 = scmp.ne.s32.totalorder %s147, %s148
      %p162 = scmp.eq.s32.totalorder %s28, 1
      %p163 = por %p161, %p162
      %p165 = scmp.ne.s32.totalorder %s148, %s164
      %p166 = scmp.eq.s32.totalorder %s28, 0
      %p167 = por %p165, %p166
      %s168 = ssub.s32 %s29, %s41
      %s169 = ssub.s32 %s30, %s37
      %s170 = sor.u32 %s168, %s169
      %p171 = scmp.eq.s32.totalorder %s170, 0
      %s173 = sadd.s32 %s172, 1
      %s174 = scalar_select %p171, %s172, %s173
      %p177 = pneg %p171
      %p178 = scmp.eq.s32.totalorder %s22, 1
      %p179 = por %p177, %p178
      %p180 = scmp.ne.s32.totalorder %s172, %s175
      %p181 = scmp.eq.s32.totalorder %s22, 0
      %p182 = por %p180, %p181
      %p183 = scmp.ne.s32.totalorder %s172, %s175
      %p184 = scmp.eq.s32.totalorder %s27, 1
      %p185 = por %p183, %p184
      %p186 = scmp.ne.s32.totalorder %s175, %s176
      %p187 = scmp.eq.s32.totalorder %s27, 0
      %p188 = por %p186, %p187
      %p189 = scmp.ne.s32.totalorder %s175, %s176
      %p190 = scmp.eq.s32.totalorder %s28, 1
      %p191 = por %p189, %p190
      %p193 = scmp.ne.s32.totalorder %s176, %s192
      %p194 = scmp.eq.s32.totalorder %s28, 0
      %p195 = por %p193, %p194
      %p196 = scmp.le.s32.totalorder 1, %s22
      %p197 = scmp.lt.s32.totalorder %s22, 3
      %p198 = pnand %p196, %p197
      %p199 = pneg %p198
      // Predicated region
      $region9: #{tpu_custom_call.1} parent=5 // pred_check
        _
      $region10: #{tpu_custom_call.1} parent=5 // pred_check_branch
        %201 = sbr.rel (%p198) target = $region12
      $region11: #{tpu_custom_call.1} parent=5 // pred_region
        %s202 = ssub.s32 %s22, 1
        // Predicated region
        $region13: #{tpu_custom_call.1} parent=11 // pred_check
          %p203 = pneg %p83
        $region14: #{tpu_custom_call.1} parent=11 // pred_check_branch
          %205 = sbr.rel (%p203) target = $region16
        $region15: #{tpu_custom_call.1} parent=11 // pred_region
          %s207 = ssub.s32 256, 256
          %208 = vsyncadd [#allocation6], %s207
          %s209 = sshll.u32 [#allocation5], 4
          %s210 = int_to_ptr.vmem [resolvable:$true] %s209
          %215 = dma.hbm_to_vmem [thread:$0]  %s1, 256, %s210, [#allocation6], 64, 64, 4
        $region16: #{tpu_custom_call.1} parent=11 // pred_fallthru
          _
        // Predicated region
        $region17: #{tpu_custom_call.1} parent=11 // pred_check
          %p216 = pneg %p104
        $region18: #{tpu_custom_call.1} parent=11 // pred_check_branch
          %218 = sbr.rel (%p216) target = $region20
        $region19: #{tpu_custom_call.1} parent=11 // pred_region
          _
        $region20: #{tpu_custom_call.1} parent=11 // pred_fallthru
          _
      $region12: #{tpu_custom_call.1} parent=5 // pred_fallthru
        _
      %p219 = scmp.lt.s32.totalorder %s22, 2
      // Predicated region
      $region21: #{tpu_custom_call.1} parent=5 // pred_check
        %p220 = pneg %p219
      $region22: #{tpu_custom_call.1} parent=5 // pred_check_branch
        %222 = sbr.rel (%p220) target = $region24
      $region23: #{tpu_custom_call.1} parent=5 // pred_region
        // Predicated region
        $region25: #{tpu_custom_call.1} parent=23 // pred_check
          %p223 = pneg %p56
        $region26: #{tpu_custom_call.1} parent=23 // pred_check_branch
          %225 = sbr.rel (%p223) target = $region28
        $region27: #{tpu_custom_call.1} parent=23 // pred_region
          %s226 = sand.u32 %s46, 1
          %s227 = scalar_lea.sflag [#allocation3], %s226
          %s228 = sand.u32 %s46, 1
          %s229 = smul.addr %s228, 4
          %s230 = scalar_lea.vmem [#allocation2], %s229
          %s232 = ssub.s32 64, 64
          %233 = vsyncadd %s227, %s232
          %s234 = sadd.s32 %s30, %s29
          %s235 = smul.addr %s234, 64
          %s236 = scalar_lea.hbm %s0, %s235
          %s238 = sshll.u32 %s230, 4
          %s239 = int_to_ptr.vmem [resolvable:$true] %s238
          %241 = dma.hbm_to_vmem [thread:$0]  %s236, 64, %s239, %s227
        $region28: #{tpu_custom_call.1} parent=23 // pred_fallthru
          _
      $region24: #{tpu_custom_call.1} parent=5 // pred_fallthru
        _
      %p242 = scmp.le.s32.totalorder 1, %s22
      %p243 = scmp.lt.s32.totalorder %s22, 3
      %p244 = pnand %p242, %p243
      %p245 = pneg %p244
      // Predicated region
      $region29: #{tpu_custom_call.1} parent=5 // pred_check
        _
      $region30: #{tpu_custom_call.1} parent=5 // pred_check_branch
        %247 = sbr.rel (%p244) target = $region32
      $region31: #{tpu_custom_call.1} parent=5 // pred_region
        %s248 = ssub.s32 %s22, 1
        %s249 = sand.u32 %s49, 1
        %s250 = scalar_lea.sflag [#allocation3], %s249
        %s251 = sand.u32 %s49, 1
        %s252 = smul.addr %s251, 4
        %s253 = scalar_lea.vmem [#allocation2], %s252
        // Predicated region
        $region33: #{tpu_custom_call.1} parent=31 // pred_check
          %p254 = pneg %p62
        $region34: #{tpu_custom_call.1} parent=31 // pred_check_branch
          %256 = sbr.rel (%p254) target = $region36
        $region35: #{tpu_custom_call.1} parent=31 // pred_region
          %257 = dma.done %s250, 64
        $region36: #{tpu_custom_call.1} parent=31 // pred_fallthru
          _
        // Predicated region
        $region37: #{tpu_custom_call.1} parent=31 // pred_check
          %p258 = pneg %p83
        $region38: #{tpu_custom_call.1} parent=31 // pred_check_branch
          %260 = sbr.rel (%p258) target = $region40
        $region39: #{tpu_custom_call.1} parent=31 // pred_region
          %261 = dma.done [#allocation6], 256
        $region40: #{tpu_custom_call.1} parent=31 // pred_fallthru
          _
        %s262 = sand.u32 %s49, 1
        %s263 = scalar_lea.sflag [#allocation3], %s262
        %s264 = sand.u32 %s49, 1
        %s265 = smul.addr %s264, 4
        %s266 = scalar_lea.vmem [#allocation2], %s265
        %p267 = pneg %p62
        %p268 = pneg %p59
        %p269 = pneg %p83
        %p270 = pneg %p80
        %p271 = pneg %p104
        %p272 = pneg %p101
        %p273 = pneg %p132
        %p274 = pneg %p129
        %s275 = sand.u32 %s119, 1
        %s276 = scalar_lea.sflag [#allocation4], %s275
        %s277 = sand.u32 %s119, 1
        %s278 = smul.addr %s277, 16
        %s279 = scalar_lea.vmem [#allocation7], %s278
        %p280 = pneg %p160
        %p281 = pneg %p157
        %s282 = sand.u32 %s27, 1
        %s283 = scalar_lea.sflag [#allocation9], %s282
        %s284 = sand.u32 %s147, 1
        %s285 = smul.addr %s284, 16
        %s286 = scalar_lea.vmem [#allocation8], %s285
        %p287 = pneg %p188
        %p288 = pneg %p185
        %s289 = sand.u32 %s27, 1
        %s290 = scalar_lea.sflag [#allocation9], %s289
        %s291 = sand.u32 %s175, 1
        %s292 = smul.addr %s291, 16
        %s293 = scalar_lea.vmem [#allocation10], %s292
        %v295 = vld [vmem:[%s253] sm:$0xf]
        %v296 = vld [vmem:[#allocation5] sm:$0xf]
        %v297 = vld [vmem:[#allocation5 + $0x4] sm:$0xf]
        %v298 = vld [vmem:[#allocation5 + $0x8] sm:$0xf]
        %v299 = vld [vmem:[#allocation5 + $0xc] sm:$0xf]
        %v300 = vld [vmem:[%s2] sm:$0x1]
        %v302 = vlaneseq
        %v303 = vshrl.u32 %v302, 7
        %v304 = vsub.s32 0, %v303
        %v305 = vrot.slane %v300, %v304
        %v311 = vunpack.c.l.b16 %v296
        %v312 = vunpack.c.l.b16 %v297
        %v313 = vunpack.c.l.b16 %v298
        %v314 = vunpack.c.l.b16 %v299
        %v315 = vpack.c.b16 %v312, %v311
        %v316 = vpack.c.b16 %v314, %v313
        %vm319 = vcmask 261120
        %v321 = vsel %vm319, %v295, 0
        %323 = vmatprep.subr.bf16.mxu0 0
        %324 = vmatpush1.bf16.msra.mxu0 0
        %325 = vmatprep.subr.bf16.mxu0 0
        %326 = vmatpush1.bf16.msra.mxu0 0
        %327 = vmatprep.subr.bf16.mxu0 0
        %328 = vmatpush1.bf16.msra.mxu0 0
        %329 = vmatprep.subr.bf16.mxu0 0
        %330 = vmatpush1.bf16.msra.mxu0 0
        %331 = vmatprep.subr.bf16.mxu0 0
        %332 = vmatpush1.bf16.msra.mxu0 0
        %333 = vmatprep.subr.bf16.mxu0 0
        %334 = vmatpush1.bf16.msra.mxu0 0
        %335 = vmatprep.subr.bf16.mxu0 0
        %336 = vmatpush1.bf16.msra.mxu0 %v316
        %337 = vmatprep.subr.bf16.mxu0 0
        %338 = vmatpush1.bf16.msra.mxu0 %v315
        %339 = vmatprep.subr.bf16.mxu0 0
        %340 = vmatpush2.bf16.msra.mxu0 0
        %341 = vmatprep.subr.bf16.mxu0 0
        %342 = vmatpush2.bf16.msra.mxu0 0
        %343 = vmatprep.subr.bf16.mxu0 0
        %344 = vmatpush2.bf16.msra.mxu0 0
        %345 = vmatprep.subr.bf16.mxu0 0
        %346 = vmatpush2.bf16.msra.mxu0 0
        %347 = vmatprep.subr.bf16.mxu0 0
        %348 = vmatpush2.bf16.msra.mxu0 0
        %349 = vmatprep.subr.bf16.mxu0 0
        %350 = vmatpush2.bf16.msra.mxu0 0
        %351 = vmatprep.subr.bf16.mxu0 0
        %352 = vmatpush2.bf16.msra.mxu0 0
        %353 = vmatprep.subr.bf16.mxu0 0
        %354 = vmatpush2.bf16.msra.mxu0 0
        %355 = vmatprep.mubr.bf16.mxu0 0
        %356 = vmatmul.mubr.bf16.gmra.mxu0 %v321
        %v357 = vpop.f32.mrf.mxu0
        %v358 = vadd.f32 %v305, %v357
        %v359 = vpop.f32.mrf.mxu0
        %v360 = vpop.f32.mrf.mxu0
        %v361 = vpop.f32.mrf.mxu0
        %362 = vdwg.mxu0
        %v363 = vpack.c.bf16 %v358, %v358
        %vm364 = vcmask 60416
        %365 = vst.msk [vmem:[%s279] sm:$0xf] %vm364, %v363
        %v367 = vunpack.c.l.b16 %v363
        %v368 = vpack.c.b16 %v367, %v367
        %369 = vrot.lane.b32.xlu0 %v368, 96
        %v370 = vpop.permute.xlu0 %369
        %372 = vst.msk [vmem:[%s286] sm:$0xf] %vm364, %v370
        %373 = vrot.lane.b32.xlu0 %v368, 64
        %v374 = vpop.permute.xlu0 %373
        %376 = vst.msk [vmem:[%s293] sm:$0xf] %vm364, %v374
        %377 = vrot.lane.b32.xlu0 %v368, 120
        %v378 = vpop.permute.xlu0 %377
        %s380 = scalar_lea.vmem %s279, 4 [#allocation7]
        %381 = vst.msk [vmem:[%s380] sm:$0xf] %vm364, %v378
        %382 = vrot.lane.b32.xlu0 %v368, 88
        %v383 = vpop.permute.xlu0 %382
        %s385 = scalar_lea.vmem %s286, 4 [#allocation8]
        %386 = vst.msk [vmem:[%s385] sm:$0xf] %vm364, %v383
        %387 = vrot.lane.b32.xlu0 %v368, 56
        %v388 = vpop.permute.xlu0 %387
        %s390 = scalar_lea.vmem %s293, 4 [#allocation10]
        %391 = vst.msk [vmem:[%s390] sm:$0xf] %vm364, %v388
        %392 = vrot.lane.b32.xlu0 %v368, 112
        %v393 = vpop.permute.xlu0 %392
        %s395 = scalar_lea.vmem %s279, 8 [#allocation7]
        %396 = vst.msk [vmem:[%s395] sm:$0xf] %vm364, %v393
        %397 = vrot.lane.b32.xlu0 %v368, 80
        %v398 = vpop.permute.xlu0 %397
        %s400 = scalar_lea.vmem %s286, 8 [#allocation8]
        %401 = vst.msk [vmem:[%s400] sm:$0xf] %vm364, %v398
        %402 = vrot.lane.b32.xlu0 %v368, 48
        %v403 = vpop.permute.xlu0 %402
        %s405 = scalar_lea.vmem %s293, 8 [#allocation10]
        %406 = vst.msk [vmem:[%s405] sm:$0xf] %vm364, %v403
        %407 = vrot.lane.b32.xlu0 %v368, 104
        %v408 = vpop.permute.xlu0 %407
        %s410 = scalar_lea.vmem %s279, 12 [#allocation7]
        %411 = vst.msk [vmem:[%s410] sm:$0xf] %vm364, %v408
        %412 = vrot.lane.b32.xlu0 %v368, 72
        %v413 = vpop.permute.xlu0 %412
        %s415 = scalar_lea.vmem %s286, 12 [#allocation8]
        %416 = vst.msk [vmem:[%s415] sm:$0xf] %vm364, %v413
        %417 = vrot.lane.b32.xlu0 %v368, 40
        %v418 = vpop.permute.xlu0 %417
        %s420 = scalar_lea.vmem %s293, 12 [#allocation10]
        %421 = vst.msk [vmem:[%s420] sm:$0xf] %vm364, %v418
        %s422 = sand.u32 %s119, 1
        %s423 = scalar_lea.sflag [#allocation4], %s422
        %s424 = sand.u32 %s119, 1
        %s425 = smul.addr %s424, 16
        %s426 = scalar_lea.vmem [#allocation7], %s425
        %s427 = sand.u32 %s27, 1
        %s428 = scalar_lea.sflag [#allocation9], %s427
        %s429 = sand.u32 %s147, 1
        %s430 = smul.addr %s429, 16
        %s431 = scalar_lea.vmem [#allocation8], %s430
        %s432 = sand.u32 %s27, 1
        %s433 = scalar_lea.sflag [#allocation9], %s432
        %s434 = sand.u32 %s175, 1
        %s435 = smul.addr %s434, 16
        %s436 = scalar_lea.vmem [#allocation10], %s435
        // Predicated region
        $region41: #{tpu_custom_call.1} parent=31 // pred_check
          %p437 = pneg %p129
        $region42: #{tpu_custom_call.1} parent=31 // pred_check_branch
          %439 = sbr.rel (%p437) target = $region44
        $region43: #{tpu_custom_call.1} parent=31 // pred_region
          %s441 = ssub.s32 256, 256
          %442 = vsyncadd %s423, %s441
          %s443 = smul.addr %s31, 4
          %s444 = sadd.s32 %s32, %s443
          %s445 = smul.addr %s444, 64
          %s446 = scalar_lea.hbm %s3, %s445
          %s447 = sshll.u32 %s426, 4
          %s448 = int_to_ptr.vmem [resolvable:$true] %s447
          %453 = dma.vmem_to_hbm [thread:$0]  %s448, 256, %s446, %s423, 64, 64, 4
        $region44: #{tpu_custom_call.1} parent=31 // pred_fallthru
          _
        // Predicated region
        $region45: #{tpu_custom_call.1} parent=31 // pred_check
          %p454 = pneg %p157
        $region46: #{tpu_custom_call.1} parent=31 // pred_check_branch
          %456 = sbr.rel (%p454) target = $region48
        $region47: #{tpu_custom_call.1} parent=31 // pred_region
          %s458 = ssub.s32 256, 256
          %459 = vsyncadd %s428, %s458
          %s460 = smul.addr %s31, 4
          %s461 = sadd.s32 %s32, %s460
          %s462 = smul.addr %s461, 64
          %s463 = scalar_lea.hbm %s4, %s462
          %s464 = sshll.u32 %s431, 4
          %s465 = int_to_ptr.vmem [resolvable:$true] %s464
          %470 = dma.vmem_to_hbm [thread:$0]  %s465, 256, %s463, %s428, 64, 64, 4
        $region48: #{tpu_custom_call.1} parent=31 // pred_fallthru
          _
        // Predicated region
        $region49: #{tpu_custom_call.1} parent=31 // pred_check
          %p471 = pneg %p185
        $region50: #{tpu_custom_call.1} parent=31 // pred_check_branch
          %473 = sbr.rel (%p471) target = $region52
        $region51: #{tpu_custom_call.1} parent=31 // pred_region
          %s475 = ssub.s32 256, 256
          %476 = vsyncadd %s433, %s475
          %s477 = smul.addr %s31, 4
          %s478 = sadd.s32 %s32, %s477
          %s479 = smul.addr %s478, 64
          %s480 = scalar_lea.hbm %s5, %s479
          %s481 = sshll.u32 %s436, 4
          %s482 = int_to_ptr.vmem [resolvable:$true] %s481
          %487 = dma.vmem_to_hbm [thread:$0]  %s482, 256, %s480, %s433, 64, 64, 4
        $region52: #{tpu_custom_call.1} parent=31 // pred_fallthru
          _
      $region32: #{tpu_custom_call.1} parent=5 // pred_fallthru
        _
      %p488 = scmp.le.s32.totalorder 2, %s22
      // Predicated region
      $region53: #{tpu_custom_call.1} parent=5 // pred_check
        %p489 = pneg %p488
      $region54: #{tpu_custom_call.1} parent=5 // pred_check_branch
        %491 = sbr.rel (%p489) target = $region56
      $region55: #{tpu_custom_call.1} parent=5 // pred_region
        %s492 = ssub.s32 %s22, 2
        // Predicated region
        $region57: #{tpu_custom_call.1} parent=55 // pred_check
          %p493 = pneg %p135
        $region58: #{tpu_custom_call.1} parent=55 // pred_check_branch
          %495 = sbr.rel (%p493) target = $region60
        $region59: #{tpu_custom_call.1} parent=55 // pred_region
          %s496 = sand.u32 %s120, 1
          %s497 = scalar_lea.sflag [#allocation4], %s496
          %s498 = sand.u32 %s120, 1
          %s499 = smul.addr %s498, 16
          %s500 = scalar_lea.vmem [#allocation7], %s499
          %501 = dma.done %s497, 256
        $region60: #{tpu_custom_call.1} parent=55 // pred_fallthru
          _
        // Predicated region
        $region61: #{tpu_custom_call.1} parent=55 // pred_check
          %p502 = pneg %p163
        $region62: #{tpu_custom_call.1} parent=55 // pred_check_branch
          %504 = sbr.rel (%p502) target = $region64
        $region63: #{tpu_custom_call.1} parent=55 // pred_region
          %s505 = sand.u32 %s28, 1
          %s506 = scalar_lea.sflag [#allocation9], %s505
          %s507 = sand.u32 %s148, 1
          %s508 = smul.addr %s507, 16
          %s509 = scalar_lea.vmem [#allocation8], %s508
          %510 = dma.done %s506, 256
        $region64: #{tpu_custom_call.1} parent=55 // pred_fallthru
          _
        // Predicated region
        $region65: #{tpu_custom_call.1} parent=55 // pred_check
          %p511 = pneg %p191
        $region66: #{tpu_custom_call.1} parent=55 // pred_check_branch
          %513 = sbr.rel (%p511) target = $region68
        $region67: #{tpu_custom_call.1} parent=55 // pred_region
          %s514 = sand.u32 %s28, 1
          %s515 = scalar_lea.sflag [#allocation9], %s514
          %s516 = sand.u32 %s176, 1
          %s517 = smul.addr %s516, 16
          %s518 = scalar_lea.vmem [#allocation10], %s517
          %519 = dma.done %s515, 256
        $region68: #{tpu_custom_call.1} parent=55 // pred_fallthru
          _
      $region56: #{tpu_custom_call.1} parent=5 // pred_fallthru
        _
    $region6: #{tpu_custom_call.1} parent=1 // loop_footer
      %s26 = sadd.s32 1, %s22
    $region7: #{tpu_custom_call.1} parent=1 // loop_footer_branch
      %21 = sbr.rel target = $region3
    $region8: #{tpu_custom_call.1} parent=1 // loop_exit
      _
    %520 = vsyncpa [#allocation3], 1
    %s521 = scalar_lea.sflag [#allocation3], 1
    %522 = vsyncpa %s521, 1
    %523 = vsyncpa [#allocation6], 1
    %524 = vsyncpa [#allocation4], 1
    %s525 = scalar_lea.sflag [#allocation4], 1
    %526 = vsyncpa %s525, 1
    %527 = vsyncpa [#allocation9], 1
    %s528 = scalar_lea.sflag [#allocation9], 1
    %529 = vsyncpa %s528, 1

</llo_original>
